<compile_context>
chip_gen: v7x
topology: tpu7x:2x2x1
jax: 0.10.0
libtpu: 0.0.40
codegen_flags: <defaults>
</compile_context>

<pallas_src>
import functools

import jax
import jax.numpy as jnp
from jax.experimental import pallas as pl
from jax.experimental.pallas import tpu as pltpu


# ---------------------------------------------------------------------------
# Pass 1: conv (+ ReLU) + streaming per-sample BN statistics
# ---------------------------------------------------------------------------
def _conv_stats_kernel(x0_ref, x1_ref, w_ref, y_ref, stats_ref, *,
                       K, T, L_out, apply_relu, im2col):
    # x0_ref, x1_ref: (Cin, T)   current and next L-block of the padded input
    # w_ref:          (Cout, K*Cin) if im2col else (K, Cout, Cin)
    # y_ref:          (Cout, T)  conv(+relu) output tile (f32)
    # stats_ref:      (Cout, 2)  running [sum, sum_sq] for this sample
    j = pl.program_id(1)

    @pl.when(j == 0)
    def _init():
        stats_ref[...] = jnp.zeros_like(stats_ref)

    # Current tile plus right halo (K-1 columns) taken from the next block.
    xw = jnp.concatenate([x0_ref[...], x1_ref[...]], axis=-1)      # (Cin, 2T)

    if im2col:
        # Fold the K taps into the contraction dim -> a single MXU push.
        cols = jnp.concatenate([xw[:, k:k + T] for k in range(K)], axis=0)
        y = jnp.dot(w_ref[...], cols, preferred_element_type=jnp.float32)
    else:
        cout = y_ref.shape[0]
        y = jnp.zeros((cout, T), jnp.float32)
        for k in range(K):                                         # small static K
            y = y + jnp.dot(w_ref[k], xw[:, k:k + T],
                            preferred_element_type=jnp.float32)

    if apply_relu:
        y = jnp.maximum(y, 0.0)

    # Lane-dense store; Pallas masks the out-of-range tail of the last tile.
    y_ref[...] = y.astype(y_ref.dtype)

    # Mask columns beyond the true output length so they do not pollute the
    # BatchNorm statistics, then accumulate sum / sum-of-squares.
    col_ids = j * T + jax.lax.broadcasted_iota(jnp.int32, (1, T), 1)
    yv = jnp.where(col_ids < L_out, y, 0.0)
    s1 = jnp.sum(yv, axis=-1, keepdims=True)                       # (Cout, 1)
    s2 = jnp.sum(yv * yv, axis=-1, keepdims=True)                  # (Cout, 1)
    stats_ref[...] += jnp.concatenate([s1, s2], axis=-1)           # (Cout, 2)


# ---------------------------------------------------------------------------
# Pass 2: apply the (already folded) BatchNorm affine transform per tile
# ---------------------------------------------------------------------------
def _bn_apply_kernel(y_ref, scale_ref, shift_ref, o_ref):
    # y_ref: (Cout, T), scale/shift: (Cout, 1), o_ref: (Cout, T)
    o_ref[...] = (y_ref[...] * scale_ref[...] + shift_ref[...]).astype(o_ref.dtype)


def _pick_tile_l(l_out: int) -> int:
    """Pick the L tile (multiple of 128), halved budget on small-VMEM chips."""
    try:
        vmem_bytes = pltpu.get_tpu_info().vmem_capacity_bytes
    except Exception:
        vmem_bytes = 128 * 1024 * 1024
    cap = 512 if vmem_bytes >= 100 * 1024 * 1024 else 256          # v7x: 64 MiB
    t = 128
    while t < cap and t < l_out:
        t *= 2
    return t


def batch_norm_conv(x_ncl, weight_oik, gamma, beta, *, activation="relu",
                    eps=1e-5):
    """x_ncl: (N, C_in, L); weight_oik: (C_out, C_in, K) (PyTorch Conv1d layout)."""
    N, Cin, L = x_ncl.shape
    Cout, Cin_w, K = weight_oik.shape
    assert Cin_w == Cin
    pad = K // 2
    L_out = L + 2 * pad - (K - 1)            # == L for odd K, L + 1 for even K

    T = _pick_tile_l(L_out)
    assert K - 1 <= T
    nL = -(-L_out // T)
    halo = K - 1
    if nL * T >= L_out + halo:               # halo fits inside the last block
        Lpad, last_blk = nL * T, nL - 1
    else:                                    # need one extra (all-zero) block
        Lpad, last_blk = (nL + 1) * T, nL

    # Only remaining wrapper-side pass over x: zero-pad the L axis (left conv
    # padding + fill to a whole number of tiles).  No transposes.
    xp = jnp.pad(x_ncl, ((0, 0), (0, 0), (pad, Lpad - L - pad)))

    # Weights: tiny; lay them out exactly as the kernel consumes them and keep
    # them in the input dtype so the MXU sees bf16 directly when x is bf16.
    w = weight_oik.astype(x_ncl.dtype)
    im2col = (K * Cin) <= 128
    if im2col:
        w_k = jnp.transpose(w, (0, 2, 1)).reshape(Cout, K * Cin)   # (Cout, K*Cin)
    else:
        w_k = jnp.transpose(w, (2, 0, 1))                          # (K, Cout, Cin)

    itemsize = jnp.dtype(x_ncl.dtype).itemsize
    per_tile = (2 * Cin * T * itemsize + Cout * T * 4
                + (K * Cin * T * 4 if im2col else 0) + int(w_k.size) * 4)
    vmem_limit = int(min(48 * 2 ** 20, max(16 * 2 ** 20, 8 * per_tile)))

    apply_relu = (activation == "relu")
    # TODO(synk): activations other than ReLU / None are not implemented.

    kernel1 = functools.partial(_conv_stats_kernel, K=K, T=T, L_out=L_out,
                                apply_relu=apply_relu, im2col=im2col)

    y_f32, stats = pl.pallas_call(
        kernel1,
        grid=(N, nL),
        in_specs=[
            pl.BlockSpec((None, Cin, T), lambda n, j: (n, 0, j)),
            pl.BlockSpec((None, Cin, T),
                         lambda n, j: (n, 0, jnp.minimum(j + 1, last_blk))),
            pl.BlockSpec(w_k.shape, lambda n, j: (0,) * w_k.ndim),
        ],
        out_specs=[
            pl.BlockSpec((None, Cout, T), lambda n, j: (n, 0, j)),
            pl.BlockSpec((None, Cout, 2), lambda n, j: (n, 0, 0)),
        ],
        out_shape=[
            jax.ShapeDtypeStruct((N, Cout, L_out), jnp.float32),
            jax.ShapeDtypeStruct((N, Cout, 2), jnp.float32),
        ],
        compiler_params=pltpu.CompilerParams(
            dimension_semantics=("parallel", "arbitrary"),
            vmem_limit_bytes=vmem_limit),
    )(xp, xp, w_k)

    # Global BatchNorm statistics (biased variance, training-mode forward):
    # tiny (N, Cout, 2) reduction + rsqrt done in plain JAX.
    count = jnp.float32(N * L_out)
    sums = jnp.sum(stats, axis=0)                                  # (Cout, 2)
    mean = sums[:, 0] / count
    var = jnp.maximum(sums[:, 1] / count - mean * mean, 0.0)
    inv = jax.lax.rsqrt(var + eps)
    g = gamma.astype(jnp.float32) * inv
    scale = g.reshape(Cout, 1)
    shift = (beta.astype(jnp.float32) - mean * g).reshape(Cout, 1)

    out_dtype = x_ncl.dtype
    aliases = {0: 0} if out_dtype == jnp.float32 else {}

    out = pl.pallas_call(
        _bn_apply_kernel,
        grid=(N, nL),
        in_specs=[
            pl.BlockSpec((None, Cout, T), lambda n, j: (n, 0, j)),
            pl.BlockSpec((Cout, 1), lambda n, j: (0, 0)),
            pl.BlockSpec((Cout, 1), lambda n, j: (0, 0)),
        ],
        out_specs=pl.BlockSpec((None, Cout, T), lambda n, j: (n, 0, j)),
        out_shape=jax.ShapeDtypeStruct((N, Cout, L_out), out_dtype),
        input_output_aliases=aliases,
        compiler_params=pltpu.CompilerParams(
            dimension_semantics=("parallel", "parallel"),
            vmem_limit_bytes=vmem_limit),
    )(y_f32, scale, shift)
    return out


# ---------------------------------------------------------------------------
# Pure-JAX reference (training-mode BatchNormConv forward) for verification.
# ---------------------------------------------------------------------------
def _reference(x_ncl, weight_oik, gamma, beta, activation, eps):
    pad = weight_oik.shape[-1] // 2
    y = jax.lax.conv_general_dilated(
        x_ncl.astype(jnp.float32), weight_oik.astype(jnp.float32),
        window_strides=(1,), padding=[(pad, pad)],
        dimension_numbers=("NCH", "OIH", "NCH"))
    if activation == "relu":
        y = jnp.maximum(y, 0.0)
    mean = jnp.mean(y, axis=(0, 2), keepdims=True)
    var = jnp.mean(jnp.square(y - mean), axis=(0, 2), keepdims=True)
    yhat = (y - mean) * jax.lax.rsqrt(var + eps)
    return yhat * gamma.reshape(1, -1, 1) + beta.reshape(1, -1, 1)


if __name__ == "__main__":
    # Small shapes implied by the module: Conv1d(in=4, out=8, kernel=5), seq=16.
    N, Cin, Cout, L, K = 2, 4, 8, 16, 5

    key = jax.random.PRNGKey(0)
    kx, kw, kg, kb = jax.random.split(key, 4)
    x = jax.random.normal(kx, (N, Cin, L), dtype=jnp.float32)

    # Conv1d weight ~ U(-1/sqrt(fan_in), 1/sqrt(fan_in)), fan_in = C_in * K.
    bound = 1.0 / (Cin * K) ** 0.5
    weight = jax.random.uniform(kw, (Cout, Cin, K), minval=-bound, maxval=bound,
                                dtype=jnp.float32)
    gamma = 1.0 + 0.1 * jax.random.normal(kg, (Cout,), dtype=jnp.float32)
    beta = 0.1 * jax.random.normal(kb, (Cout,), dtype=jnp.float32)

    out = batch_norm_conv(x, weight, gamma, beta, activation="relu")
    out = jax.block_until_ready(out)
    assert out.shape == (N, Cout, L), out.shape

    ref = _reference(x, weight, gamma, beta, "relu", 1e-5)
    err = float(jnp.max(jnp.abs(out - ref)))
    assert err < 5e-3, f"max abs error vs reference: {err}"
    print("KERNEL_OK")
</pallas_src>

<mosaic_0001>
module attributes {stable_mosaic.version = 11 : i64} {
  func.func @_conv_stats_kernel(%arg0: i32, %arg1: i32, %arg2: memref<1x4x128xf32, #tpu.memory_space<vmem>>, %arg3: memref<1x4x128xf32, #tpu.memory_space<vmem>>, %arg4: memref<8x20xf32, #tpu.memory_space<vmem>>, %arg5: memref<1x8x128xf32, #tpu.memory_space<vmem>>, %arg6: memref<1x8x2xf32, #tpu.memory_space<vmem>>) attributes {dimension_semantics = [#tpu.dimension_semantics<parallel>, #tpu.dimension_semantics<arbitrary>], iteration_bounds = array<i64: 2, 1>, scalar_prefetch = 0 : i64, scratch_operands = 0 : i64, tpu.core_type = #tpu.core_type<tc>, window_params = [{transform_indices = @transform_0, window_bounds = array<i64: 1, 4, 128>}, {transform_indices = @transform_1, window_bounds = array<i64: 1, 4, 128>}, {pipeline_mode = #tpu.pipeline_mode<synchronous>, transform_indices = @transform_2, window_bounds = array<i64: 8, 20>}, {transform_indices = @transform_3, window_bounds = array<i64: 1, 8, 128>}, {transform_indices = @transform_4, window_bounds = array<i64: 1, 8, 2>}]} {
    %c0_i32 = arith.constant 0 : i32
    %0 = arith.cmpi eq, %arg1, %c0_i32 : i32
    %1 = arith.extui %0 : i1 to i32
    %c0_i32_0 = arith.constant 0 : i32
    %2 = arith.cmpi ne, %1, %c0_i32_0 : i32
    scf.if %2 {
      %cst_21 = arith.constant 0.000000e+00 : f32
      %43 = vector.broadcast %cst_21 : f32 to vector<8x2xf32>
      %c0_22 = arith.constant 0 : index
      %c0_23 = arith.constant 0 : index
      %c0_24 = arith.constant 0 : index
      %44 = vector.load %arg6[%c0_22, %c0_23, %c0_24] : memref<1x8x2xf32, #tpu.memory_space<vmem>>, vector<1x8x2xf32>
      %45 = vector.shape_cast %44 : vector<1x8x2xf32> to vector<8x2xf32>
      %46 = vector.shape_cast %43 : vector<8x2xf32> to vector<1x8x2xf32>
      tpu.vector_store %arg6[%c0_22, %c0_23, %c0_24], %46 {strides = array<i32>} : memref<1x8x2xf32, #tpu.memory_space<vmem>>, vector<1x8x2xf32>,
    } else {
    }
    %c0 = arith.constant 0 : index
    %c0_1 = arith.constant 0 : index
    %c0_2 = arith.constant 0 : index
    %3 = vector.load %arg2[%c0, %c0_1, %c0_2] : memref<1x4x128xf32, #tpu.memory_space<vmem>>, vector<1x4x128xf32>
    %4 = vector.shape_cast %3 : vector<1x4x128xf32> to vector<4x128xf32>
    %c0_3 = arith.constant 0 : index
    %c0_4 = arith.constant 0 : index
    %c0_5 = arith.constant 0 : index
    %5 = vector.load %arg3[%c0_3, %c0_4, %c0_5] : memref<1x4x128xf32, #tpu.memory_space<vmem>>, vector<1x4x128xf32>
    %6 = vector.shape_cast %5 : vector<1x4x128xf32> to vector<4x128xf32>
    %7 = tpu.concatenate %4, %6 in 1 : vector<4x128xf32>, vector<4x128xf32> -> vector<4x256xf32>
    %8 = vector.extract_strided_slice %7 {offsets = [0, 0], sizes = [4, 128], strides = [1, 1]} : vector<4x256xf32> to vector<4x128xf32>
    %9 = vector.extract_strided_slice %7 {offsets = [0, 1], sizes = [4, 128], strides = [1, 1]} : vector<4x256xf32> to vector<4x128xf32>
    %10 = vector.extract_strided_slice %7 {offsets = [0, 2], sizes = [4, 128], strides = [1, 1]} : vector<4x256xf32> to vector<4x128xf32>
    %11 = vector.extract_strided_slice %7 {offsets = [0, 3], sizes = [4, 128], strides = [1, 1]} : vector<4x256xf32> to vector<4x128xf32>
    %12 = vector.extract_strided_slice %7 {offsets = [0, 4], sizes = [4, 128], strides = [1, 1]} : vector<4x256xf32> to vector<4x128xf32>
    %13 = tpu.concatenate %8, %9, %10, %11, %12 in 0 : vector<4x128xf32>, vector<4x128xf32>, vector<4x128xf32>, vector<4x128xf32>, vector<4x128xf32> -> vector<20x128xf32>
    %c0_6 = arith.constant 0 : index
    %c0_7 = arith.constant 0 : index
    %14 = vector.load %arg4[%c0_6, %c0_7] : memref<8x20xf32, #tpu.memory_space<vmem>>, vector<8x20xf32>
    %cst = arith.constant dense<0.000000e+00> : vector<8x128xf32>
    %15 = tpu.matmul %14, %13, %cst {dimension_numbers = #tpu.dot_dimension_numbers<[1], [0], [0], [1], [0, 0, 1, 1], [], []>} : vector<8x20xf32>, vector<20x128xf32>, vector<8x128xf32> -> vector<8x128xf32>
    %cst_8 = arith.constant 0.000000e+00 : f32
    %16 = vector.broadcast %cst_8 : f32 to vector<8x128xf32>
    %17 = arith.maximumf %15, %16 : vector<8x128xf32>
    %c0_9 = arith.constant 0 : index
    %c0_10 = arith.constant 0 : index
    %c0_11 = arith.constant 0 : index
    %18 = vector.load %arg5[%c0_9, %c0_10, %c0_11] : memref<1x8x128xf32, #tpu.memory_space<vmem>>, vector<1x8x128xf32>
    %19 = vector.shape_cast %18 : vector<1x8x128xf32> to vector<8x128xf32>
    %20 = vector.shape_cast %17 : vector<8x128xf32> to vector<1x8x128xf32>
    tpu.vector_store %arg5[%c0_9, %c0_10, %c0_11], %20 {strides = array<i32>} : memref<1x8x128xf32, #tpu.memory_space<vmem>>, vector<1x8x128xf32>,
    %c128_i32 = arith.constant 128 : i32
    %21 = arith.muli %arg1, %c128_i32 : i32
    %22 = tpu.iota {dimensions = array<i32: 1>} : vector<1x128xi32>
    %23 = vector.broadcast %21 : i32 to vector<1x128xi32>
    %24 = arith.addi %23, %22 : vector<1x128xi32>
    %c16_i32 = arith.constant 16 : i32
    %25 = vector.broadcast %c16_i32 : i32 to vector<1x128xi32>
    %26 = arith.cmpi slt, %24, %25 : vector<1x128xi32>
    %cst_12 = arith.constant 0.000000e+00 : f32
    %27 = vector.shape_cast %26 : vector<1x128xi1> to vector<1x128xi1>
    %28 = vector.broadcast %27 : vector<1x128xi1> to vector<8x128xi1>
    %29 = vector.broadcast %cst_12 : f32 to vector<8x128xf32>
    %30 = arith.select %28, %17, %29 : vector<8x128xi1>, vector<8x128xf32>
    %cst_13 = arith.constant dense<0.000000e+00> : vector<8xf32>
    %31 = vector.multi_reduction <add>, %30, %cst_13 [1] : vector<8x128xf32> to vector<8xf32>
    %32 = vector.shape_cast %31 : vector<8xf32> to vector<8x1xf32>
    %33 = arith.mulf %30, %30 : vector<8x128xf32>
    %cst_14 = arith.constant dense<0.000000e+00> : vector<8xf32>
    %34 = vector.multi_reduction <add>, %33, %cst_14 [1] : vector<8x128xf32> to vector<8xf32>
    %35 = vector.shape_cast %34 : vector<8xf32> to vector<8x1xf32>
    %c0_15 = arith.constant 0 : index
    %c0_16 = arith.constant 0 : index
    %c0_17 = arith.constant 0 : index
    %36 = vector.load %arg6[%c0_15, %c0_16, %c0_17] : memref<1x8x2xf32, #tpu.memory_space<vmem>>, vector<1x8x2xf32>
    %37 = vector.shape_cast %36 : vector<1x8x2xf32> to vector<8x2xf32>
    %38 = tpu.concatenate %32, %35 in 1 : vector<8x1xf32>, vector<8x1xf32> -> vector<8x2xf32>
    %39 = arith.addf %37, %38 : vector<8x2xf32>
    %c0_18 = arith.constant 0 : index
    %c0_19 = arith.constant 0 : index
    %c0_20 = arith.constant 0 : index
    %40 = vector.load %arg6[%c0_18, %c0_19, %c0_20] : memref<1x8x2xf32, #tpu.memory_space<vmem>>, vector<1x8x2xf32>
    %41 = vector.shape_cast %40 : vector<1x8x2xf32> to vector<8x2xf32>
    %42 = vector.shape_cast %39 : vector<8x2xf32> to vector<1x8x2xf32>
    tpu.vector_store %arg6[%c0_18, %c0_19, %c0_20], %42 {strides = array<i32>} : memref<1x8x2xf32, #tpu.memory_space<vmem>>, vector<1x8x2xf32>,
    return
  }
  func.func @transform_0(%arg0: i32, %arg1: i32) -> (i32, i32, i32) {
    %c0_i32 = arith.constant 0 : i32
    %c0_i32_0 = arith.constant 0 : i32
    return %arg0, %c0_i32, %arg1 : i32, i32, i32
  }
  func.func @transform_1(%arg0: i32, %arg1: i32) -> (i32, i32, i32) {
    %c1_i32 = arith.constant 1 : i32
    %0 = arith.addi %arg1, %c1_i32 : i32
    %c0_i32 = arith.constant 0 : i32
    %1 = arith.minsi %0, %c0_i32 : i32
    %c0_i32_0 = arith.constant 0 : i32
    %c0_i32_1 = arith.constant 0 : i32
    return %arg0, %c0_i32_0, %1 : i32, i32, i32
  }
  func.func @transform_2(%arg0: i32, %arg1: i32) -> (i32, i32) {
    %c0_i32 = arith.constant 0 : i32
    %c0_i32_0 = arith.constant 0 : i32
    %c0_i32_1 = arith.constant 0 : i32
    return %c0_i32, %c0_i32_0 : i32, i32
  }
  func.func @transform_3(%arg0: i32, %arg1: i32) -> (i32, i32, i32) {
    %c0_i32 = arith.constant 0 : i32
    %c0_i32_0 = arith.constant 0 : i32
    return %arg0, %c0_i32, %arg1 : i32, i32, i32
  }
  func.func @transform_4(%arg0: i32, %arg1: i32) -> (i32, i32, i32) {
    %c0_i32 = arith.constant 0 : i32
    %c0_i32_0 = arith.constant 0 : i32
    %c0_i32_1 = arith.constant 0 : i32
    return %arg0, %c0_i32, %c0_i32_0 : i32, i32, i32
  }
}

</mosaic_0001>

<llo_original>
// kernel: tpu_custom_call.1
$region0: #{tpu_custom_call.1}
  #allocation0 [shape = 'u32[]', space=smem, size = 0x4, offset = 0x4, fixed_abs, tag = 'smem constant byte address 0x4 - core index']
  #allocation1 [shape = 'u32[144,128]{1,0:T(1,128)}', space=vmem, size = 0x12000, scoped, tag = 'internal scratch']
  %s0 = inlined_call_operand.hbm [shape: f32[2,4,128], index: 0, kind: input, shape index: {}]
  %s1 = inlined_call_operand.hbm [shape: f32[2,4,128], index: 1, kind: input, shape index: {}]
  %s2 = inlined_call_operand.hbm [shape: f32[8,20], index: 2, kind: input, shape index: {}]
  %s3 = inlined_call_operand.hbm [shape: f32[2,8,16], index: 3, kind: output, shape index: {0}]
  %s4 = inlined_call_operand.vmem [shape: f32[2,8,2], index: 4, kind: output, shape index: {1}]
  %5 = xla_tuple %s3, %s4
  %s6 = sld [smem:[#allocation0]]
  $region69: #{tpu_custom_call.1} parent=0
    _
  %s8 = ssub.s32 1, %s6
  %s9 = scalar_select 0, %s8, %s6
  $region1: #{tpu_custom_call.1} parent=0
    #allocation2 [shape = 'u8[4096]{0}', space=vmem, size = 0x1000, scoped, tag = 'input window, operand 0']
    #allocation3 [shape = 's32[2]{0}', space=sflag, size = 0x8, scoped, tag = 'scoped memory for tpu_custom_call.1']
    #allocation4 [shape = 's32[2]{0}', space=sflag, size = 0x8, scoped, tag = 'scoped memory for tpu_custom_call.1']
    #allocation5 [shape = 'u8[4096]{0}', space=vmem, size = 0x1000, scoped, tag = 'input window, operand 1']
    #allocation6 [shape = 's32[2]{0}', space=sflag, size = 0x8, scoped, tag = 'scoped memory for tpu_custom_call.1']
    #allocation7 [shape = 'u8[4096]{0}', space=vmem, size = 0x1000, scoped, tag = 'input window, operand 2, single buffered']
    #allocation8 [shape = 'u8[8192]{0}', space=vmem, size = 0x2000, scoped, tag = 'output window, operand 0']
    %10 = vsyncpa [#allocation3], 0
    %s11 = scalar_lea.sflag [#allocation3], 1
    %12 = vsyncpa %s11, 0
    %13 = vsyncpa [#allocation6], 0
    %s14 = scalar_lea.sflag [#allocation6], 1
    %15 = vsyncpa %s14, 0
    %16 = vsyncpa [#allocation4], 0
    %s17 = scalar_lea.sflag [#allocation4], 1
    %18 = vsyncpa %s17, 0
    loop: start=0, step=1, limit=4
    $region2: #{tpu_custom_call.1} parent=1 // loop_pre_header
      _
    $region3: #{tpu_custom_call.1} parent=1 // loop_header
      %s20 = sphi 0, %s24
      %p21 = scmp.ge.s32.totalorder %s20, 4
      %s27 = sphi 0, %s39
      %s28 = sphi 0, %s35
      %s29 = sphi 0, %s27
      %s30 = sphi 0, %s28
      %s31 = sphi 0, %s29
      %s32 = sphi 0, %s30
      %s44 = sphi 0, %s46
      %s47 = sphi 0, %s44
      %s48 = sphi 0, %s47
      %s64 = sphi 0, %s48
      %s78 = sphi 0, %s80
      %s81 = sphi 0, %s78
      %s82 = sphi 0, %s81
      %s98 = sphi 0, %s82
      %s102 = sphi 0, %s102
      %s104 = sphi 0, %s102
      %s105 = sphi 0, %s104
      %s119 = sphi 0, %s105
      %s127 = sphi 0, %s129
      %s130 = sphi 0, %s127
      %s131 = sphi 0, %s130
      %s147 = sphi 0, %s131
      %s153 = sphi 0, %s155
      %s156 = sphi 0, %s153
      %s157 = sphi 0, %s156
      %s173 = sphi 0, %s157
    $region4: #{tpu_custom_call.1} parent=1 // loop_header_branch
      %23 = sbr.rel (%p21) target = $region8
    $region5: #{tpu_custom_call.1} parent=1 // loop_body
      %s25 = ssub.s32 %s20, 1
      %s26 = ssub.s32 %s20, 2
      %s33 = sadd.s32 1, %s28
      %p34 = scmp.ge.s32.totalorder %s33, 1
      %s35 = scalar_select %p34, 0, %s33
      %s36 = sadd.s32 1, %s27
      %s37 = scalar_select %p34, %s36, %s27
      %p38 = scmp.ge.s32.totalorder %s37, 2
      %s39 = scalar_select %p38, 0, %s37
      %s40 = ssub.s32 %s27, %s39
      %s41 = ssub.s32 %s28, %s35
      %s42 = sor.u32 %s40, %s41
      %p43 = scmp.eq.s32.totalorder %s42, 0
      %s45 = sadd.s32 %s44, 1
      %s46 = scalar_select %p43, %s44, %s45
      %p49 = pneg %p43
      %p50 = scmp.eq.s32.totalorder %s20, 1
      %p51 = por %p49, %p50
      %p52 = scmp.ne.s32.totalorder %s44, %s47
      %p53 = scmp.eq.s32.totalorder %s20, 0
      %p54 = por %p52, %p53
      %p55 = scmp.ne.s32.totalorder %s44, %s47
      %p56 = scmp.eq.s32.totalorder %s25, 1
      %p57 = por %p55, %p56
      %p58 = scmp.ne.s32.totalorder %s47, %s48
      %p59 = scmp.eq.s32.totalorder %s25, 0
      %p60 = por %p58, %p59
      %p61 = scmp.ne.s32.totalorder %s47, %s48
      %p62 = scmp.eq.s32.totalorder %s26, 1
      %p63 = por %p61, %p62
      %p65 = scmp.ne.s32.totalorder %s48, %s64
      %p66 = scmp.eq.s32.totalorder %s26, 0
      %p67 = por %p65, %p66
      %s68 = sadd.s32 %s28, 1
      %p69 = scmp.lt.s32.totalorder %s68, 0
      %s70 = scalar_select %p69, %s68, 0
      %s71 = sadd.s32 %s35, 1
      %p72 = scmp.lt.s32.totalorder %s71, 0
      %s73 = scalar_select %p72, %s71, 0
      %s74 = ssub.s32 %s27, %s39
      %s75 = ssub.s32 %s70, %s73
      %s76 = sor.u32 %s74, %s75
      %p77 = scmp.eq.s32.totalorder %s76, 0
      %s79 = sadd.s32 %s78, 1
      %s80 = scalar_select %p77, %s78, %s79
      %p83 = pneg %p77
      %p84 = scmp.eq.s32.totalorder %s20, 1
      %p85 = por %p83, %p84
      %p86 = scmp.ne.s32.totalorder %s78, %s81
      %p87 = scmp.eq.s32.totalorder %s20, 0
      %p88 = por %p86, %p87
      %p89 = scmp.ne.s32.totalorder %s78, %s81
      %p90 = scmp.eq.s32.totalorder %s25, 1
      %p91 = por %p89, %p90
      %p92 = scmp.ne.s32.totalorder %s81, %s82
      %p93 = scmp.eq.s32.totalorder %s25, 0
      %p94 = por %p92, %p93
      %p95 = scmp.ne.s32.totalorder %s81, %s82
      %p96 = scmp.eq.s32.totalorder %s26, 1
      %p97 = por %p95, %p96
      %p99 = scmp.ne.s32.totalorder %s82, %s98
      %p100 = scmp.eq.s32.totalorder %s26, 0
      %p101 = por %p99, %p100
      %s103 = sadd.s32 %s102, 1
      %p106 = scmp.eq.s32.totalorder %s20, 1
      %p107 = scmp.ne.s32.totalorder %s102, %s104
      %p108 = scmp.eq.s32.totalorder %s20, 0
      %p109 = por %p107, %p108
      %p110 = scmp.ne.s32.totalorder %s102, %s104
      %p111 = scmp.eq.s32.totalorder %s25, 1
      %p112 = por %p110, %p111
      %p113 = scmp.ne.s32.totalorder %s104, %s105
      %p114 = scmp.eq.s32.totalorder %s25, 0
      %p115 = por %p113, %p114
      %p116 = scmp.ne.s32.totalorder %s104, %s105
      %p117 = scmp.eq.s32.totalorder %s26, 1
      %p118 = por %p116, %p117
      %p120 = scmp.ne.s32.totalorder %s105, %s119
      %p121 = scmp.eq.s32.totalorder %s26, 0
      %p122 = por %p120, %p121
      %s123 = ssub.s32 %s27, %s39
      %s124 = ssub.s32 %s28, %s35
      %s125 = sor.u32 %s123, %s124
      %p126 = scmp.eq.s32.totalorder %s125, 0
      %s128 = sadd.s32 %s127, 1
      %s129 = scalar_select %p126, %s127, %s128
      %p132 = pneg %p126
      %p133 = scmp.eq.s32.totalorder %s20, 1
      %p134 = por %p132, %p133
      %p135 = scmp.ne.s32.totalorder %s127, %s130
      %p136 = scmp.eq.s32.totalorder %s20, 0
      %p137 = por %p135, %p136
      %p138 = scmp.ne.s32.totalorder %s127, %s130
      %p139 = scmp.eq.s32.totalorder %s25, 1
      %p140 = por %p138, %p139
      %p141 = scmp.ne.s32.totalorder %s130, %s131
      %p142 = scmp.eq.s32.totalorder %s25, 0
      %p143 = por %p141, %p142
      %p144 = scmp.ne.s32.totalorder %s130, %s131
      %p145 = scmp.eq.s32.totalorder %s26, 1
      %p146 = por %p144, %p145
      %p148 = scmp.ne.s32.totalorder %s131, %s147
      %p149 = scmp.eq.s32.totalorder %s26, 0
      %p150 = por %p148, %p149
      %s151 = ssub.s32 %s27, %s39
      %p152 = scmp.eq.s32.totalorder %s151, 0
      %s154 = sadd.s32 %s153, 1
      %s155 = scalar_select %p152, %s153, %s154
      %p158 = pneg %p152
      %p159 = scmp.eq.s32.totalorder %s20, 1
      %p160 = por %p158, %p159
      %p161 = scmp.ne.s32.totalorder %s153, %s156
      %p162 = scmp.eq.s32.totalorder %s20, 0
      %p163 = por %p161, %p162
      %p164 = scmp.ne.s32.totalorder %s153, %s156
      %p165 = scmp.eq.s32.totalorder %s25, 1
      %p166 = por %p164, %p165
      %p167 = scmp.ne.s32.totalorder %s156, %s157
      %p168 = scmp.eq.s32.totalorder %s25, 0
      %p169 = por %p167, %p168
      %p170 = scmp.ne.s32.totalorder %s156, %s157
      %p171 = scmp.eq.s32.totalorder %s26, 1
      %p172 = por %p170, %p171
      %p174 = scmp.ne.s32.totalorder %s157, %s173
      %p175 = scmp.eq.s32.totalorder %s26, 0
      %p176 = por %p174, %p175
      %p177 = scmp.le.s32.totalorder 1, %s20
      %p178 = scmp.lt.s32.totalorder %s20, 3
      %p179 = pnand %p177, %p178
      %p180 = pneg %p179
      // Predicated region
      $region9: #{tpu_custom_call.1} parent=5 // pred_check
        _
      $region10: #{tpu_custom_call.1} parent=5 // pred_check_branch
        %182 = sbr.rel (%p179) target = $region12
      $region11: #{tpu_custom_call.1} parent=5 // pred_region
        %s183 = ssub.s32 %s20, 1
        // Predicated region
        $region13: #{tpu_custom_call.1} parent=11 // pred_check
          %p184 = pneg %p115
        $region14: #{tpu_custom_call.1} parent=11 // pred_check_branch
          %186 = sbr.rel (%p184) target = $region16
        $region15: #{tpu_custom_call.1} parent=11 // pred_region
          %s188 = ssub.s32 128, 128
          %189 = vsyncadd [#allocation6], %s188
          %s191 = sshll.u32 [#allocation7], 4
          %s192 = int_to_ptr.vmem [resolvable:$true] %s191
          %194 = dma.hbm_to_vmem [thread:$0]  %s2, 128, %s192, [#allocation6]
        $region16: #{tpu_custom_call.1} parent=11 // pred_fallthru
          _
      $region12: #{tpu_custom_call.1} parent=5 // pred_fallthru
        _
      %p195 = scmp.lt.s32.totalorder %s20, 2
      // Predicated region
      $region17: #{tpu_custom_call.1} parent=5 // pred_check
        %p196 = pneg %p195
      $region18: #{tpu_custom_call.1} parent=5 // pred_check_branch
        %198 = sbr.rel (%p196) target = $region20
      $region19: #{tpu_custom_call.1} parent=5 // pred_region
        // Predicated region
        $region21: #{tpu_custom_call.1} parent=19 // pred_check
          %p199 = pneg %p54
        $region22: #{tpu_custom_call.1} parent=19 // pred_check_branch
          %201 = sbr.rel (%p199) target = $region24
        $region23: #{tpu_custom_call.1} parent=19 // pred_region
          %s202 = sand.u32 %s44, 1
          %s203 = scalar_lea.sflag [#allocation3], %s202
          %s204 = sand.u32 %s44, 1
          %s205 = smul.addr %s204, 4
          %s206 = scalar_lea.vmem [#allocation2], %s205
          %s208 = ssub.s32 64, 64
          %209 = vsyncadd %s203, %s208
          %s210 = sadd.s32 %s28, %s27
          %s211 = smul.addr %s210, 64
          %s212 = scalar_lea.hbm %s0, %s211
          %s214 = sshll.u32 %s206, 4
          %s215 = int_to_ptr.vmem [resolvable:$true] %s214
          %217 = dma.hbm_to_vmem [thread:$0]  %s212, 64, %s215, %s203
        $region24: #{tpu_custom_call.1} parent=19 // pred_fallthru
          _
        // Predicated region
        $region25: #{tpu_custom_call.1} parent=19 // pred_check
          %p218 = pneg %p88
        $region26: #{tpu_custom_call.1} parent=19 // pred_check_branch
          %220 = sbr.rel (%p218) target = $region28
        $region27: #{tpu_custom_call.1} parent=19 // pred_region
          %s221 = sand.u32 %s20, 1
          %s222 = scalar_lea.sflag [#allocation6], %s221
          %s223 = sand.u32 %s78, 1
          %s224 = smul.addr %s223, 4
          %s225 = scalar_lea.vmem [#allocation5], %s224
          %s226 = sadd.s32 %s28, 1
          %p227 = scmp.lt.s32.totalorder %s226, 0
          %s228 = scalar_select %p227, %s226, 0
          %s230 = ssub.s32 64, 64
          %231 = vsyncadd %s222, %s230
          %s232 = sadd.s32 %s228, %s27
          %s233 = smul.addr %s232, 64
          %s234 = scalar_lea.hbm %s1, %s233
          %s236 = sshll.u32 %s225, 4
          %s237 = int_to_ptr.vmem [resolvable:$true] %s236
          %239 = dma.hbm_to_vmem [thread:$0]  %s234, 64, %s237, %s222
        $region28: #{tpu_custom_call.1} parent=19 // pred_fallthru
          _
      $region20: #{tpu_custom_call.1} parent=5 // pred_fallthru
        _
      %p240 = scmp.le.s32.totalorder 1, %s20
      %p241 = scmp.lt.s32.totalorder %s20, 3
      %p242 = pnand %p240, %p241
      %p243 = pneg %p242
      // Predicated region
      $region29: #{tpu_custom_call.1} parent=5 // pred_check
        _
      $region30: #{tpu_custom_call.1} parent=5 // pred_check_branch
        %245 = sbr.rel (%p242) target = $region32
      $region31: #{tpu_custom_call.1} parent=5 // pred_region
        %s246 = ssub.s32 %s20, 1
        %s247 = sand.u32 %s47, 1
        %s248 = scalar_lea.sflag [#allocation3], %s247
        %s249 = sand.u32 %s47, 1
        %s250 = smul.addr %s249, 4
        %s251 = scalar_lea.vmem [#allocation2], %s250
        // Predicated region
        $region33: #{tpu_custom_call.1} parent=31 // pred_check
          %p252 = pneg %p60
        $region34: #{tpu_custom_call.1} parent=31 // pred_check_branch
          %254 = sbr.rel (%p252) target = $region36
        $region35: #{tpu_custom_call.1} parent=31 // pred_region
          %255 = dma.done %s248, 64
        $region36: #{tpu_custom_call.1} parent=31 // pred_fallthru
          _
        %s256 = sand.u32 %s25, 1
        %s257 = scalar_lea.sflag [#allocation6], %s256
        %s258 = sand.u32 %s81, 1
        %s259 = smul.addr %s258, 4
        %s260 = scalar_lea.vmem [#allocation5], %s259
        // Predicated region
        $region37: #{tpu_custom_call.1} parent=31 // pred_check
          %p261 = pneg %p94
        $region38: #{tpu_custom_call.1} parent=31 // pred_check_branch
          %263 = sbr.rel (%p261) target = $region40
        $region39: #{tpu_custom_call.1} parent=31 // pred_region
          %264 = dma.done %s257, 64
        $region40: #{tpu_custom_call.1} parent=31 // pred_fallthru
          _
        // Predicated region
        $region41: #{tpu_custom_call.1} parent=31 // pred_check
          %p265 = pneg %p115
        $region42: #{tpu_custom_call.1} parent=31 // pred_check_branch
          %267 = sbr.rel (%p265) target = $region44
        $region43: #{tpu_custom_call.1} parent=31 // pred_region
          %268 = dma.done [#allocation6], 128
        $region44: #{tpu_custom_call.1} parent=31 // pred_fallthru
          _
        %s269 = sand.u32 %s47, 1
        %s270 = scalar_lea.sflag [#allocation3], %s269
        %s271 = sand.u32 %s47, 1
        %s272 = smul.addr %s271, 4
        %s273 = scalar_lea.vmem [#allocation2], %s272
        %p274 = pneg %p60
        %p275 = pneg %p57
        %s276 = sand.u32 %s25, 1
        %s277 = scalar_lea.sflag [#allocation6], %s276
        %s278 = sand.u32 %s81, 1
        %s279 = smul.addr %s278, 4
        %s280 = scalar_lea.vmem [#allocation5], %s279
        %p281 = pneg %p94
        %p282 = pneg %p91
        %p283 = pneg %p115
        %p284 = pneg %p112
        %p285 = pneg %p143
        %p286 = pneg %p140
        %s287 = sand.u32 %s130, 1
        %s288 = scalar_lea.sflag [#allocation4], %s287
        %s289 = sand.u32 %s130, 1
        %s290 = smul.addr %s289, 8
        %s291 = scalar_lea.vmem [#allocation8], %s290
        %p292 = pneg %p169
        %p293 = pneg %p166
        %p294 = scmp.lt.s32.totalorder %s29, 1
        %s295 = scalar_select %p294, %s29, 1
        %s296 = smul.addr %s295, 8
        %s297 = scalar_lea.vmem %s4, %s296
        %s298 = sadd.s32 %s30, 1
        %p299 = scmp.lt.s32.totalorder %s298, 0
        %s300 = scalar_select %p299, %s298, 0
        %p301 = scmp.lt.s32.totalorder %s29, 1
        %s302 = scalar_select %p301, %s29, 1
        %s303 = smul.addr %s302, 8
        %s304 = scalar_lea.vmem %s4, %s303
        %p305 = scmp.eq.s32.totalorder %s30, 0
        // Predicated region
        $region45: #{tpu_custom_call.1} parent=31 // pred_check
          %p306 = pneg %p305
        $region46: #{tpu_custom_call.1} parent=31 // pred_check_branch
          %308 = sbr.rel (%p306) target = $region48
        $region47: #{tpu_custom_call.1} parent=31 // pred_region
          %vm309 = vcmask 15360
          %310 = vst.msk [vmem:[%s304] sm:$0xff] %vm309, 0.0
        $region48: #{tpu_custom_call.1} parent=31 // pred_fallthru
          _
        %v311 = vld [vmem:[%s251] sm:$0xf]
        %v312 = vld [vmem:[%s260] sm:$0xf]
        %v315 = vrot.slane %v311, 4
        %v316 = vrot.slane %v312, 4
        %317 = vrot.lane.b32.xlu0 %v315, 127
        %v318 = vpop.permute.xlu0 %317
        %319 = vrot.lane.b32.xlu0 %v316, 127
        %v320 = vpop.permute.xlu0 %319
        %vm321 = vcmask 1039360
        %v322 = vsel %vm321, %v318, %v320
        %324 = vrot.lane.b32.xlu0 %v311, 126
        %v325 = vpop.permute.xlu0 %324
        %326 = vrot.lane.b32.xlu0 %v312, 126
        %v327 = vpop.permute.xlu0 %326
        %vm328 = vcmask 1031168
        %v329 = vsel %vm328, %v325, %v327
        %331 = vrot.lane.b32.xlu0 %v315, 125
        %v332 = vpop.permute.xlu0 %331
        %333 = vrot.lane.b32.xlu0 %v316, 125
        %v334 = vpop.permute.xlu0 %333
        %vm335 = vcmask 1022976
        %v336 = vsel %vm335, %v332, %v334
        %338 = vrot.lane.b32.xlu0 %v311, 124
        %v339 = vpop.permute.xlu0 %338
        %340 = vrot.lane.b32.xlu0 %v312, 124
        %v341 = vpop.permute.xlu0 %340
        %vm342 = vcmask 1014784
        %v343 = vsel %vm342, %v339, %v341
        %vm344 = vcmask 1043456
        %v345 = vsel %vm344, %v311, %v322
        %v346 = vsel %vm344, %v329, %v336
        %v347 = vld [vmem:[#allocation7] sm:$0xff]
        %vm348 = vcmask 162816
        %v350 = vsel %vm348, %v347, 0
        %v352 = vsel %vm344, %v343, 0
        %354 = vmatprep.subr.mxu0 0.0
        %355 = vmatpush1.msra.mxu0 %v345
        %356 = vmatprep.subr.mxu0 0.0
        %357 = vmatpush1.msra.mxu0 %v346
        %358 = vmatprep.subr.mxu0 0.0
        %359 = vmatpush1.msra.mxu0 %v352
        %360 = vmatprep.subr.mxu0 0.0
        %361 = vmatpush1.msra.mxu0 0.0
        %362 = vmatprep.subr.mxu0 0.0
        %363 = vmatpush1.msra.mxu0 0.0
        %364 = vmatprep.subr.mxu0 0.0
        %365 = vmatpush1.msra.mxu0 0.0
        %366 = vmatprep.subr.mxu0 0.0
        %367 = vmatpush1.msra.mxu0 0.0
        %368 = vmatprep.subr.mxu0 0.0
        %369 = vmatpush1.msra.mxu0 0.0
        %370 = vmatprep.subr.mxu0 0.0
        %371 = vmatpush1.msra.mxu0 0.0
        %372 = vmatprep.subr.mxu0 0.0
        %373 = vmatpush1.msra.mxu0 0.0
        %374 = vmatprep.subr.mxu0 0.0
        %375 = vmatpush1.msra.mxu0 0.0
        %376 = vmatprep.subr.mxu0 0.0
        %377 = vmatpush1.msra.mxu0 0.0
        %378 = vmatprep.subr.mxu0 0.0
        %379 = vmatpush1.msra.mxu0 0.0
        %380 = vmatprep.subr.mxu0 0.0
        %381 = vmatpush1.msra.mxu0 0.0
        %382 = vmatprep.subr.mxu0 0.0
        %383 = vmatpush1.msra.mxu0 0.0
        %384 = vmatprep.subr.mxu0 0.0
        %385 = vmatpush1.msra.mxu0 0.0
        %386 = vmatprep.subr.mxu0 0.0
        %387 = vmatpush1.msra.mxu0 0.0
        %388 = vmatprep.subr.mxu0 0.0
        %389 = vmatpush1.msra.mxu0 0.0
        %390 = vmatprep.subr.mxu0 0.0
        %391 = vmatpush1.msra.mxu0 0.0
        %392 = vmatprep.subr.mxu0 0.0
        %393 = vmatpush1.msra.mxu0 0.0
        %394 = vmatprep.subr.mxu0 0.0
        %395 = vmatpush1.msra.mxu0 0.0
        %396 = vmatprep.subr.mxu0 0.0
        %397 = vmatpush1.msra.mxu0 0.0
        %398 = vmatprep.subr.mxu0 0.0
        %399 = vmatpush1.msra.mxu0 0.0
        %400 = vmatprep.subr.mxu0 0.0
        %401 = vmatpush1.msra.mxu0 0.0
        %402 = vmatprep.subr.mxu0 0.0
        %403 = vmatpush1.msra.mxu0 0.0
        %404 = vmatprep.subr.mxu0 0.0
        %405 = vmatpush1.msra.mxu0 0.0
        %406 = vmatprep.subr.mxu0 0.0
        %407 = vmatpush1.msra.mxu0 0.0
        %408 = vmatprep.subr.mxu0 0.0
        %409 = vmatpush1.msra.mxu0 0.0
        %410 = vmatprep.subr.mxu0 0.0
        %411 = vmatpush1.msra.mxu0 0.0
        %412 = vmatprep.subr.mxu0 0.0
        %413 = vmatpush1.msra.mxu0 0.0
        %414 = vmatprep.subr.mxu0 0.0
        %415 = vmatpush1.msra.mxu0 0.0
        %416 = vmatprep.subr.mxu0 0.0
        %417 = vmatpush1.msra.mxu0 0.0
        %418 = vmatprep.mubr.f32.mxu0 0.0
        %419 = vmatmul.mubr.f32.gmra.mrb[0].mxu0 %v350
        %v420 = vpop.f32.mrb[0].mxu0
        %v421 = vadd.f32 0.0, %v420
        %v422 = vpop.f32.mrb[0].mxu0
        %423 = vdwg.mxu0
        %v424 = vmax.f32 %v421, 0.0
        %425 = vst [vmem:[%s291] sm:$0xff] %v424
        %s426 = smul.u32 %s30, 128
        %v427 = vlaneseq
        %v428 = vand.u32 %v427, 127
        %v429 = vstv %s426
        %v430 = vadd.s32 %v429, %v428
        %vm431 = vcmp.lt.s32.totalorder %v430, 16
        %v432 = vsel %vm431, 1, 0
        %vm433 = vcmp.eq.s32.totalorder %v432, 1
        %v434 = vsel %vm433, %v424, 0.0
        %435 = vadd.xlane.f32.xlu0 %v434
        %v436 = vpop.xlane.xlu0 %435
        %v437 = vmul.f32 %v434, %v434
        %438 = vadd.xlane.f32.xlu0 %v437
        %v439 = vpop.xlane.xlu0 %438
        %v440 = vld [vmem:[%s304] sm:$0xff]
        %vm441 = vcmask 7168
        %v442 = vsel %vm441, %v436, %v439
        %v443 = vadd.f32 %v440, %v442
        %vm444 = vcmask 15360
        %445 = vst.msk [vmem:[%s304] sm:$0xff] %vm444, %v443
        %s446 = sand.u32 %s130, 1
        %s447 = scalar_lea.sflag [#allocation4], %s446
        %s448 = sand.u32 %s130, 1
        %s449 = smul.addr %s448, 8
        %s450 = scalar_lea.vmem [#allocation8], %s449
        %p451 = scmp.lt.s32.totalorder %s29, 1
        %s452 = scalar_select %p451, %s29, 1
        %s453 = smul.addr %s452, 8
        %s454 = scalar_lea.vmem %s4, %s453
        // Predicated region
        $region49: #{tpu_custom_call.1} parent=31 // pred_check
          %p455 = pneg %p140
        $region50: #{tpu_custom_call.1} parent=31 // pred_check_branch
          %457 = sbr.rel (%p455) target = $region52
        $region51: #{tpu_custom_call.1} parent=31 // pred_region
          %s459 = ssub.s32 128, 128
          %460 = vsyncadd %s447, %s459
          %s461 = sadd.s32 %s30, %s29
          %s462 = smul.addr %s461, 128
          %s463 = scalar_lea.hbm %s3, %s462
          %s465 = sshll.u32 %s450, 4
          %s466 = int_to_ptr.vmem [resolvable:$true] %s465
          %468 = dma.vmem_to_hbm [thread:$0]  %s466, 128, %s463, %s447
        $region52: #{tpu_custom_call.1} parent=31 // pred_fallthru
          _
        // Predicated region
        $region53: #{tpu_custom_call.1} parent=31 // pred_check
          %p469 = pneg %p166
        $region54: #{tpu_custom_call.1} parent=31 // pred_check_branch
          %471 = sbr.rel (%p469) target = $region56
        $region55: #{tpu_custom_call.1} parent=31 // pred_region
          _
        $region56: #{tpu_custom_call.1} parent=31 // pred_fallthru
          _
      $region32: #{tpu_custom_call.1} parent=5 // pred_fallthru
        _
      %p472 = scmp.le.s32.totalorder 2, %s20
      // Predicated region
      $region57: #{tpu_custom_call.1} parent=5 // pred_check
        %p473 = pneg %p472
      $region58: #{tpu_custom_call.1} parent=5 // pred_check_branch
        %475 = sbr.rel (%p473) target = $region60
      $region59: #{tpu_custom_call.1} parent=5 // pred_region
        %s476 = ssub.s32 %s20, 2
        // Predicated region
        $region61: #{tpu_custom_call.1} parent=59 // pred_check
          %p477 = pneg %p146
        $region62: #{tpu_custom_call.1} parent=59 // pred_check_branch
          %479 = sbr.rel (%p477) target = $region64
        $region63: #{tpu_custom_call.1} parent=59 // pred_region
          %s480 = sand.u32 %s131, 1
          %s481 = scalar_lea.sflag [#allocation4], %s480
          %s482 = sand.u32 %s131, 1
          %s483 = smul.addr %s482, 8
          %s484 = scalar_lea.vmem [#allocation8], %s483
          %485 = dma.done %s481, 128
        $region64: #{tpu_custom_call.1} parent=59 // pred_fallthru
          _
        // Predicated region
        $region65: #{tpu_custom_call.1} parent=59 // pred_check
          %p486 = pneg %p172
        $region66: #{tpu_custom_call.1} parent=59 // pred_check_branch
          %488 = sbr.rel (%p486) target = $region68
        $region67: #{tpu_custom_call.1} parent=59 // pred_region
          %p489 = scmp.lt.s32.totalorder %s31, 1
          %s490 = scalar_select %p489, %s31, 1
          %s491 = smul.addr %s490, 8
          %s492 = scalar_lea.vmem %s4, %s491
        $region68: #{tpu_custom_call.1} parent=59 // pred_fallthru
          _
      $region60: #{tpu_custom_call.1} parent=5 // pred_fallthru
        _
    $region6: #{tpu_custom_call.1} parent=1 // loop_footer
      %s24 = sadd.s32 1, %s20
    $region7: #{tpu_custom_call.1} parent=1 // loop_footer_branch
      %19 = sbr.rel target = $region3
    $region8: #{tpu_custom_call.1} parent=1 // loop_exit
      _
    %493 = vsyncpa [#allocation3], 1
    %s494 = scalar_lea.sflag [#allocation3], 1
    %495 = vsyncpa %s494, 1
    %496 = vsyncpa [#allocation6], 1
    %s497 = scalar_lea.sflag [#allocation6], 1
    %498 = vsyncpa %s497, 1
    %499 = vsyncpa [#allocation4], 1
    %s500 = scalar_lea.sflag [#allocation4], 1
    %501 = vsyncpa %s500, 1

</llo_original>
